<compile_context>
chip_gen: v5e
topology: v5e:2x2
jax: 0.10.0
libtpu: 0.0.40
codegen_flags: <defaults>
</compile_context>

<pallas_src>
import functools

import jax
import jax.numpy as jnp
from jax.experimental import pallas as pl
from jax.experimental.pallas import tpu as pltpu


def _ican_partials_kernel(g_logits_ref, i_logits_ref, g_tgt_ref, i_tgt_ref, out_ref,
                          *, batch_size, focal_gamma, id_chunk):
    pid = pl.program_id(0)

    # ---------------- gender head (+ focal), lane-dense: (Cg, TB), batch on lanes ----------------
    gl = g_logits_ref[...].astype(jnp.float32)              # (Cg, TB)
    n_gender, tb = gl.shape
    row0 = pid * tb
    g_tgt = g_tgt_ref[...]                                   # (1, TB) int32

    lane_valid = (jax.lax.broadcasted_iota(jnp.int32, (1, tb), 1) + row0) < batch_size

    g_max = jnp.max(gl, axis=0, keepdims=True)                               # (1, TB)
    g_logz = g_max + jnp.log(jnp.sum(jnp.exp(gl - g_max), axis=0, keepdims=True))
    g_cls = jax.lax.broadcasted_iota(jnp.int32, gl.shape, 0)
    g_at = jnp.sum(jnp.where(g_cls == g_tgt, gl, 0.0), axis=0, keepdims=True)
    g_nll = g_logz - g_at                                                    # per-sample CE
    g_smooth = n_gender * g_logz - jnp.sum(gl, axis=0, keepdims=True)        # per-sample -sum(logp)

    pt = jnp.exp(-g_nll)
    q = 1.0 - pt
    if focal_gamma == 2.0:
        q_pow = q * q                       # explicit square: no transcendentals, no log(0)
    elif focal_gamma == 1.0:
        q_pow = q
    elif focal_gamma == 0.0:
        q_pow = jnp.ones_like(q)
    else:
        q_pow = jnp.power(jnp.maximum(q, 0.0), focal_gamma)
    focal = q_pow * g_nll                   # focal_alpha applied in the wrapper combine

    # jnp.where (not multiply) so NaN/Inf garbage in ragged-tile lanes cannot poison the sums.
    g_nll_sum = jnp.sum(jnp.where(lane_valid, g_nll, 0.0))
    g_smooth_sum = jnp.sum(jnp.where(lane_valid, g_smooth, 0.0))
    focal_sum = jnp.sum(jnp.where(lane_valid, focal, 0.0))

    # ---------------- identity head: (TB, Ci), fused chunked online pass over classes ----------------
    tb_i = i_logits_ref.shape[0]
    n_identity = i_logits_ref.shape[1]
    i_tgt = i_tgt_ref[...]                                   # (TB, 1) int32
    sub_valid = (jax.lax.broadcasted_iota(jnp.int32, (tb_i, 1), 0) + row0) < batch_size

    run_max = jnp.full((tb_i, 1), -jnp.inf, dtype=jnp.float32)
    run_se = jnp.zeros((tb_i, 1), jnp.float32)
    run_sum = jnp.zeros((tb_i, 1), jnp.float32)
    run_tgt = jnp.zeros((tb_i, 1), jnp.float32)
    for c0 in range(0, n_identity, id_chunk):                # static, short unrolled sweep
        cw = min(id_chunk, n_identity - c0)
        x = i_logits_ref[:, c0:c0 + cw].astype(jnp.float32)  # only a chunk-sized f32 temp
        lane = jax.lax.broadcasted_iota(jnp.int32, (tb_i, cw), 1) + c0
        run_sum = run_sum + jnp.sum(x, axis=-1, keepdims=True)
        run_tgt = run_tgt + jnp.sum(jnp.where(lane == i_tgt, x, 0.0), axis=-1, keepdims=True)
        cmax = jnp.max(x, axis=-1, keepdims=True)
        new_max = jnp.maximum(run_max, cmax)
        run_se = (run_se * jnp.exp(run_max - new_max)
                  + jnp.sum(jnp.exp(x - new_max), axis=-1, keepdims=True))
        run_max = new_max

    i_logz = run_max + jnp.log(run_se)
    i_nll = i_logz - run_tgt                                 # per-sample CE
    i_smooth = n_identity * i_logz - run_sum                 # per-sample -sum(logp)

    i_nll_sum = jnp.sum(jnp.where(sub_valid, i_nll, 0.0))
    i_smooth_sum = jnp.sum(jnp.where(sub_valid, i_smooth, 0.0))

    # ---------------- per-tile partials: row k of the (8,128) output tile carries partial k ----------------
    rows = jax.lax.broadcasted_iota(jnp.int32, (8, 128), 0)
    ptile = (jnp.where(rows == 0, g_nll_sum, 0.0)
             + jnp.where(rows == 1, g_smooth_sum, 0.0)
             + jnp.where(rows == 2, focal_sum, 0.0)
             + jnp.where(rows == 3, i_nll_sum, 0.0)
             + jnp.where(rows == 4, i_smooth_sum, 0.0))
    out_ref[0] = ptile


def _vmem_capacity_bytes():
    try:
        info = pltpu.get_tpu_info()
        cap = getattr(info, "vmem_capacity_bytes", None)
        if cap:
            return int(cap)
    except Exception:
        pass
    return 64 * 1024 * 1024      # conservative (v7x physical VMEM per core)


def improved_ican_loss(gender_logits, identity_logits, gender_targets, identity_targets,
                       gender_weight=0.5, identity_weight=0.5,
                       focal_alpha=0.25, focal_gamma=2.0,
                       gender_label_smoothing=0.1, identity_label_smoothing=0.05,
                       block_b=None):
    """Returns (total_loss, combined_gender_loss, identity_loss) as float32 scalars."""
    B, n_gender = gender_logits.shape
    n_identity = identity_logits.shape[-1]
    id_chunk = min(max(n_identity, 1), 512)

    cap = _vmem_capacity_bytes()
    budget = min(max(cap // 3, 16 * 1024 * 1024), 48 * 1024 * 1024)
    vmem_limit = min(max(cap // 2, 32 * 1024 * 1024), 100 * 1024 * 1024)

    # --- batch tile: sized from the actual VMEM footprint (no full f32 block copy anymore). ---
    if block_b is None:
        ci_pad = -(-n_identity // 128) * 128                 # lane padding of the VMEM block
        per_row = (ci_pad * 2 * identity_logits.dtype.itemsize   # identity block, double-buffered
                   + 64                                       # gender block (Cg -> 8/16 sublanes)
                   + 64                                       # gender targets (1, tb)
                   + 1024                                     # identity targets (tb, 1), lane-padded
                   + 3 * 4 * id_chunk                         # live f32 chunk temps
                   + 10 * 512)                                # (tb,1) keepdims temps, conservative
        block_b = max(128, min(8192, (budget // per_row) // 128 * 128))

    if B <= block_b:
        tb, num_tiles = B, 1                                  # full-array blocks
    else:
        tb = max((block_b // 128) * 128, 128)                 # lane-dense gender layout
        num_tiles = -(-B // tb)                               # ragged last tile masked in-kernel

    gender_targets = gender_targets.astype(jnp.int32)
    identity_targets = identity_targets.astype(jnp.int32)

    # Gender head is tiny (2 classes): feed it transposed so batch sits on the lane axis.
    g_logits_t = jnp.transpose(gender_logits)                 # (Cg, B) — negligible HBM traffic
    g_tgt = gender_targets.reshape(1, B)                      # (1, B)  lane-dense
    i_tgt = identity_targets.reshape(B, 1)                    # (B, 1)

    kernel = functools.partial(
        _ican_partials_kernel,
        batch_size=B,
        focal_gamma=float(focal_gamma),
        id_chunk=id_chunk,
    )

    isz_i = identity_logits.dtype.itemsize
    isz_g = gender_logits.dtype.itemsize
    cost = pl.CostEstimate(
        flops=int(B * (8 * n_identity + 12 * n_gender + 24)),
        transcendentals=int(B * (n_identity + n_gender + 3)),
        bytes_accessed=int(B * (n_identity * isz_i + n_gender * isz_g + 8)
                           + num_tiles * 8 * 128 * 4),
    )

    partial_out = pl.pallas_call(
        kernel,
        out_shape=jax.ShapeDtypeStruct((num_tiles, 8, 128), jnp.float32),
        grid_spec=pltpu.PrefetchScalarGridSpec(
            num_scalar_prefetch=0,
            grid=(num_tiles,),
            in_specs=[
                pl.BlockSpec((n_gender, tb), lambda i: (0, i)),    # gender logits (Cg, B)
                pl.BlockSpec((tb, n_identity), lambda i: (i, 0)),  # identity logits (B, Ci)
                pl.BlockSpec((1, tb), lambda i: (0, i)),           # gender targets (1, B)
                pl.BlockSpec((tb, 1), lambda i: (i, 0)),           # identity targets (B, 1)
            ],
            out_specs=pl.BlockSpec((1, 8, 128), lambda i: (i, 0, 0)),
        ),
        compiler_params=pltpu.CompilerParams(
            dimension_semantics=("parallel",),                     # per-tile partials -> megacore-safe
            vmem_limit_bytes=int(vmem_limit),
        ),
        cost_estimate=cost,
    )(g_logits_t, identity_logits, g_tgt, i_tgt)

    # -------- tiny 5-value combine + weighting in plain JAX --------
    partials = jnp.sum(partial_out[:, :, 0], axis=0)               # (8,)
    inv_b = 1.0 / B
    g_nll_mean = partials[0] * inv_b
    g_smooth_mean = partials[1] * inv_b
    focal_mean = float(focal_alpha) * partials[2] * inv_b
    i_nll_mean = partials[3] * inv_b
    i_smooth_mean = partials[4] * inv_b

    gls = float(gender_label_smoothing)
    ils = float(identity_label_smoothing)
    gender_loss = (1.0 - gls) * g_nll_mean + (gls / n_gender) * g_smooth_mean
    identity_loss = (1.0 - ils) * i_nll_mean + (ils / n_identity) * i_smooth_mean
    combined_gender_loss = 0.7 * gender_loss + 0.3 * focal_mean
    total_loss = float(gender_weight) * combined_gender_loss + float(identity_weight) * identity_loss
    return total_loss, combined_gender_loss, identity_loss


# ---------------- pure-JAX reference (for correctness check) ----------------
def _ce_label_smoothing_ref(logits, targets, eps):
    logp = jax.nn.log_softmax(logits.astype(jnp.float32), axis=-1)
    nll = -jnp.take_along_axis(logp, targets[:, None], axis=-1)[:, 0]
    smooth = -jnp.sum(logp, axis=-1)
    c = logits.shape[-1]
    return (1.0 - eps) * nll.mean() + (eps / c) * smooth.mean()


def _reference(gender_logits, identity_logits, gender_targets, identity_targets,
               gender_weight=0.5, identity_weight=0.5, alpha=0.25, gamma=2.0):
    gender_loss = _ce_label_smoothing_ref(gender_logits, gender_targets, 0.1)
    identity_loss = _ce_label_smoothing_ref(identity_logits, identity_targets, 0.05)
    logp = jax.nn.log_softmax(gender_logits.astype(jnp.float32), axis=-1)
    ce = -jnp.take_along_axis(logp, gender_targets[:, None], axis=-1)[:, 0]
    pt = jnp.exp(-ce)
    focal = (alpha * (1.0 - pt) ** gamma * ce).mean()
    combined = 0.7 * gender_loss + 0.3 * focal
    total = gender_weight * combined + identity_weight * identity_loss
    return total, combined, identity_loss


def _check(kernel_out, ref_out):
    for a, b in zip(kernel_out, ref_out):
        assert jnp.allclose(a, b, atol=5e-5, rtol=5e-5), (a, b)


if __name__ == "__main__":
    key = jax.random.PRNGKey(0)
    k1, k2, k3, k4 = jax.random.split(key, 4)

    # ---- Test 1: small shapes, single tile ----
    B, NUM_GENDER, NUM_ID = 8, 2, 16
    gender_logits = jax.random.normal(k1, (B, NUM_GENDER), dtype=jnp.float32)
    identity_logits = jax.random.normal(k2, (B, NUM_ID), dtype=jnp.float32)
    gender_targets = jax.random.randint(k3, (B,), 0, NUM_GENDER, dtype=jnp.int32)
    identity_targets = jax.random.randint(k4, (B,), 0, NUM_ID, dtype=jnp.int32)

    out1 = improved_ican_loss(gender_logits, identity_logits, gender_targets, identity_targets)
    jax.block_until_ready(out1)
    _check(out1, _reference(gender_logits, identity_logits, gender_targets, identity_targets))

    # ---- Test 2: multi-tile path with ragged last tile (no HBM padding, in-kernel masking) ----
    k5, k6, k7, k8 = jax.random.split(jax.random.PRNGKey(1), 4)
    B2 = 260
    g2 = jax.random.normal(k5, (B2, NUM_GENDER), dtype=jnp.float32)
    i2 = jax.random.normal(k6, (B2, NUM_ID), dtype=jnp.float32)
    gt2 = jax.random.randint(k7, (B2,), 0, NUM_GENDER, dtype=jnp.int32)
    it2 = jax.random.randint(k8, (B2,), 0, NUM_ID, dtype=jnp.int32)

    out2 = improved_ican_loss(g2, i2, gt2, it2, block_b=128)
    jax.block_until_ready(out2)
    _check(out2, _reference(g2, i2, gt2, it2))

    # ---- Test 3: bf16 logits + multi-chunk fused identity pass (Ci > 512) ----
    k9, k10, k11, k12 = jax.random.split(jax.random.PRNGKey(2), 4)
    B3, NUM_ID3 = 64, 640
    g3 = jax.random.normal(k9, (B3, NUM_GENDER), dtype=jnp.bfloat16)
    i3 = jax.random.normal(k10, (B3, NUM_ID3), dtype=jnp.bfloat16)
    gt3 = jax.random.randint(k11, (B3,), 0, NUM_GENDER, dtype=jnp.int32)
    it3 = jax.random.randint(k12, (B3,), 0, NUM_ID3, dtype=jnp.int32)

    out3 = improved_ican_loss(g3, i3, gt3, it3)
    jax.block_until_ready(out3)
    _check(out3, _reference(g3, i3, gt3, it3))

    print("KERNEL_OK")
</pallas_src>

<mosaic_0001>
module attributes {stable_mosaic.version = 11 : i64} {
  func.func @_ican_partials_kernel(%arg0: i32, %arg1: memref<2x8xf32, #tpu.memory_space<vmem>>, %arg2: memref<8x16xf32, #tpu.memory_space<vmem>>, %arg3: memref<1x8xi32, #tpu.memory_space<vmem>>, %arg4: memref<8x1xi32, #tpu.memory_space<vmem>>, %arg5: memref<1x8x128xf32, #tpu.memory_space<vmem>>) attributes {dimension_semantics = [#tpu.dimension_semantics<parallel>], iteration_bounds = array<i64: 1>, scalar_prefetch = 0 : i64, scratch_operands = 0 : i64, tpu.core_type = #tpu.core_type<tc>, window_params = [{transform_indices = @transform_0, window_bounds = array<i64: 2, 8>}, {transform_indices = @transform_1, window_bounds = array<i64: 8, 16>}, {transform_indices = @transform_2, window_bounds = array<i64: 1, 8>}, {transform_indices = @transform_3, window_bounds = array<i64: 8, 1>}, {transform_indices = @transform_4, window_bounds = array<i64: 1, 8, 128>}]} {
    %c0 = arith.constant 0 : index
    %c0_0 = arith.constant 0 : index
    %0 = vector.load %arg1[%c0, %c0_0] : memref<2x8xf32, #tpu.memory_space<vmem>>, vector<2x8xf32>
    %c8_i32 = arith.constant 8 : i32
    %1 = arith.muli %arg0, %c8_i32 : i32
    %c0_1 = arith.constant 0 : index
    %c0_2 = arith.constant 0 : index
    %2 = vector.load %arg3[%c0_1, %c0_2] : memref<1x8xi32, #tpu.memory_space<vmem>>, vector<1x8xi32>
    %3 = tpu.iota {dimensions = array<i32: 1>} : vector<1x8xi32>
    %4 = vector.broadcast %1 : i32 to vector<1x8xi32>
    %5 = arith.addi %3, %4 : vector<1x8xi32>
    %c8_i32_3 = arith.constant 8 : i32
    %6 = vector.broadcast %c8_i32_3 : i32 to vector<1x8xi32>
    %7 = arith.cmpi slt, %5, %6 : vector<1x8xi32>
    %cst = arith.constant dense<0xFF800000> : vector<8xf32>
    %8 = vector.multi_reduction <maximumf>, %0, %cst [0] : vector<2x8xf32> to vector<8xf32>
    %9 = vector.shape_cast %8 : vector<8xf32> to vector<1x8xf32>
    %10 = vector.broadcast %9 : vector<1x8xf32> to vector<2x8xf32>
    %11 = arith.subf %0, %10 : vector<2x8xf32>
    %12 = math.exp %11 : vector<2x8xf32>
    %cst_4 = arith.constant dense<0.000000e+00> : vector<8xf32>
    %13 = vector.multi_reduction <add>, %12, %cst_4 [0] : vector<2x8xf32> to vector<8xf32>
    %14 = vector.shape_cast %13 : vector<8xf32> to vector<1x8xf32>
    %15 = math.log %14 : vector<1x8xf32>
    %16 = arith.addf %9, %15 : vector<1x8xf32>
    %17 = tpu.iota {dimensions = array<i32: 0>} : vector<2x8xi32>
    %18 = vector.broadcast %2 : vector<1x8xi32> to vector<2x8xi32>
    %19 = arith.cmpi eq, %17, %18 : vector<2x8xi32>
    %cst_5 = arith.constant 0.000000e+00 : f32
    %20 = vector.broadcast %cst_5 : f32 to vector<2x8xf32>
    %21 = arith.select %19, %0, %20 : vector<2x8xi1>, vector<2x8xf32>
    %cst_6 = arith.constant dense<0.000000e+00> : vector<8xf32>
    %22 = vector.multi_reduction <add>, %21, %cst_6 [0] : vector<2x8xf32> to vector<8xf32>
    %23 = vector.shape_cast %22 : vector<8xf32> to vector<1x8xf32>
    %24 = arith.subf %16, %23 : vector<1x8xf32>
    %cst_7 = arith.constant 2.000000e+00 : f32
    %25 = vector.broadcast %cst_7 : f32 to vector<1x8xf32>
    %26 = arith.mulf %25, %16 : vector<1x8xf32>
    %cst_8 = arith.constant dense<0.000000e+00> : vector<8xf32>
    %27 = vector.multi_reduction <add>, %0, %cst_8 [0] : vector<2x8xf32> to vector<8xf32>
    %28 = vector.shape_cast %27 : vector<8xf32> to vector<1x8xf32>
    %29 = arith.subf %26, %28 : vector<1x8xf32>
    %cst_9 = arith.constant 0.000000e+00 : f32
    %30 = vector.broadcast %cst_9 : f32 to vector<1x8xf32>
    %31 = arith.subf %30, %24 : vector<1x8xf32>
    %32 = math.exp %31 : vector<1x8xf32>
    %cst_10 = arith.constant 1.000000e+00 : f32
    %33 = vector.broadcast %cst_10 : f32 to vector<1x8xf32>
    %34 = arith.subf %33, %32 : vector<1x8xf32>
    %35 = arith.mulf %34, %34 : vector<1x8xf32>
    %36 = arith.mulf %35, %24 : vector<1x8xf32>
    %cst_11 = arith.constant 0.000000e+00 : f32
    %37 = vector.broadcast %cst_11 : f32 to vector<1x8xf32>
    %38 = arith.select %7, %24, %37 : vector<1x8xi1>, vector<1x8xf32>
    %39 = vector.shape_cast %38 : vector<1x8xf32> to vector<1x1x8xf32>
    %cst_12 = arith.constant dense<0.000000e+00> : vector<1xf32>
    %40 = vector.multi_reduction <add>, %39, %cst_12 [1, 2] : vector<1x1x8xf32> to vector<1xf32>
    %41 = vector.shape_cast %40 : vector<1xf32> to vector<1x1x1xf32>
    %42 = vector.extract %41[0, 0, 0] : f32 from vector<1x1x1xf32>
    %cst_13 = arith.constant 0.000000e+00 : f32
    %43 = vector.broadcast %cst_13 : f32 to vector<1x8xf32>
    %44 = arith.select %7, %29, %43 : vector<1x8xi1>, vector<1x8xf32>
    %45 = vector.shape_cast %44 : vector<1x8xf32> to vector<1x1x8xf32>
    %cst_14 = arith.constant dense<0.000000e+00> : vector<1xf32>
    %46 = vector.multi_reduction <add>, %45, %cst_14 [1, 2] : vector<1x1x8xf32> to vector<1xf32>
    %47 = vector.shape_cast %46 : vector<1xf32> to vector<1x1x1xf32>
    %48 = vector.extract %47[0, 0, 0] : f32 from vector<1x1x1xf32>
    %cst_15 = arith.constant 0.000000e+00 : f32
    %49 = vector.broadcast %cst_15 : f32 to vector<1x8xf32>
    %50 = arith.select %7, %36, %49 : vector<1x8xi1>, vector<1x8xf32>
    %51 = vector.shape_cast %50 : vector<1x8xf32> to vector<1x1x8xf32>
    %cst_16 = arith.constant dense<0.000000e+00> : vector<1xf32>
    %52 = vector.multi_reduction <add>, %51, %cst_16 [1, 2] : vector<1x1x8xf32> to vector<1xf32>
    %53 = vector.shape_cast %52 : vector<1xf32> to vector<1x1x1xf32>
    %54 = vector.extract %53[0, 0, 0] : f32 from vector<1x1x1xf32>
    %c0_17 = arith.constant 0 : index
    %c0_18 = arith.constant 0 : index
    %55 = vector.load %arg4[%c0_17, %c0_18] : memref<8x1xi32, #tpu.memory_space<vmem>>, vector<8x1xi32>
    %56 = tpu.iota {dimensions = array<i32: 0>} : vector<8x1xi32>
    %57 = vector.broadcast %1 : i32 to vector<8x1xi32>
    %58 = arith.addi %56, %57 : vector<8x1xi32>
    %c8_i32_19 = arith.constant 8 : i32
    %59 = vector.broadcast %c8_i32_19 : i32 to vector<8x1xi32>
    %60 = arith.cmpi slt, %58, %59 : vector<8x1xi32>
    %cst_20 = arith.constant 0xFF800000 : f32
    %61 = vector.broadcast %cst_20 : f32 to vector<8x1xf32>
    %cst_21 = arith.constant 0.000000e+00 : f32
    %62 = vector.broadcast %cst_21 : f32 to vector<8x1xf32>
    %cst_22 = arith.constant 0.000000e+00 : f32
    %63 = vector.broadcast %cst_22 : f32 to vector<8x1xf32>
    %cst_23 = arith.constant 0.000000e+00 : f32
    %64 = vector.broadcast %cst_23 : f32 to vector<8x1xf32>
    %c0_24 = arith.constant 0 : index
    %c0_25 = arith.constant 0 : index
    %65 = vector.load %arg2[%c0_24, %c0_25] : memref<8x16xf32, #tpu.memory_space<vmem>>, vector<8x16xf32>
    %66 = tpu.iota {dimensions = array<i32: 1>} : vector<8x16xi32>
    %c0_i32 = arith.constant 0 : i32
    %67 = vector.broadcast %c0_i32 : i32 to vector<8x16xi32>
    %68 = arith.addi %66, %67 : vector<8x16xi32>
    %cst_26 = arith.constant dense<0.000000e+00> : vector<8xf32>
    %69 = vector.multi_reduction <add>, %65, %cst_26 [1] : vector<8x16xf32> to vector<8xf32>
    %70 = vector.shape_cast %69 : vector<8xf32> to vector<8x1xf32>
    %71 = arith.addf %63, %70 : vector<8x1xf32>
    %72 = vector.broadcast %55 : vector<8x1xi32> to vector<8x16xi32>
    %73 = arith.cmpi eq, %68, %72 : vector<8x16xi32>
    %cst_27 = arith.constant 0.000000e+00 : f32
    %74 = vector.broadcast %cst_27 : f32 to vector<8x16xf32>
    %75 = arith.select %73, %65, %74 : vector<8x16xi1>, vector<8x16xf32>
    %cst_28 = arith.constant dense<0.000000e+00> : vector<8xf32>
    %76 = vector.multi_reduction <add>, %75, %cst_28 [1] : vector<8x16xf32> to vector<8xf32>
    %77 = vector.shape_cast %76 : vector<8xf32> to vector<8x1xf32>
    %78 = arith.addf %64, %77 : vector<8x1xf32>
    %cst_29 = arith.constant dense<0xFF800000> : vector<8xf32>
    %79 = vector.multi_reduction <maximumf>, %65, %cst_29 [1] : vector<8x16xf32> to vector<8xf32>
    %80 = vector.shape_cast %79 : vector<8xf32> to vector<8x1xf32>
    %81 = arith.maximumf %61, %80 : vector<8x1xf32>
    %82 = arith.subf %61, %81 : vector<8x1xf32>
    %83 = math.exp %82 : vector<8x1xf32>
    %84 = arith.mulf %62, %83 : vector<8x1xf32>
    %85 = vector.broadcast %81 : vector<8x1xf32> to vector<8x16xf32>
    %86 = arith.subf %65, %85 : vector<8x16xf32>
    %87 = math.exp %86 : vector<8x16xf32>
    %cst_30 = arith.constant dense<0.000000e+00> : vector<8xf32>
    %88 = vector.multi_reduction <add>, %87, %cst_30 [1] : vector<8x16xf32> to vector<8xf32>
    %89 = vector.shape_cast %88 : vector<8xf32> to vector<8x1xf32>
    %90 = arith.addf %84, %89 : vector<8x1xf32>
    %91 = math.log %90 : vector<8x1xf32>
    %92 = arith.addf %81, %91 : vector<8x1xf32>
    %93 = arith.subf %92, %78 : vector<8x1xf32>
    %cst_31 = arith.constant 1.600000e+01 : f32
    %94 = vector.broadcast %cst_31 : f32 to vector<8x1xf32>
    %95 = arith.mulf %94, %92 : vector<8x1xf32>
    %96 = arith.subf %95, %71 : vector<8x1xf32>
    %cst_32 = arith.constant 0.000000e+00 : f32
    %97 = vector.broadcast %cst_32 : f32 to vector<8x1xf32>
    %98 = arith.select %60, %93, %97 : vector<8x1xi1>, vector<8x1xf32>
    %99 = vector.shape_cast %98 : vector<8x1xf32> to vector<1x8x1xf32>
    %cst_33 = arith.constant dense<0.000000e+00> : vector<1xf32>
    %100 = vector.multi_reduction <add>, %99, %cst_33 [1, 2] : vector<1x8x1xf32> to vector<1xf32>
    %101 = vector.shape_cast %100 : vector<1xf32> to vector<1x1x1xf32>
    %102 = vector.extract %101[0, 0, 0] : f32 from vector<1x1x1xf32>
    %cst_34 = arith.constant 0.000000e+00 : f32
    %103 = vector.broadcast %cst_34 : f32 to vector<8x1xf32>
    %104 = arith.select %60, %96, %103 : vector<8x1xi1>, vector<8x1xf32>
    %105 = vector.shape_cast %104 : vector<8x1xf32> to vector<1x8x1xf32>
    %cst_35 = arith.constant dense<0.000000e+00> : vector<1xf32>
    %106 = vector.multi_reduction <add>, %105, %cst_35 [1, 2] : vector<1x8x1xf32> to vector<1xf32>
    %107 = vector.shape_cast %106 : vector<1xf32> to vector<1x1x1xf32>
    %108 = vector.extract %107[0, 0, 0] : f32 from vector<1x1x1xf32>
    %109 = tpu.iota {dimensions = array<i32: 0>} : vector<8x128xi32>
    %c0_i32_36 = arith.constant 0 : i32
    %110 = vector.broadcast %c0_i32_36 : i32 to vector<8x128xi32>
    %111 = arith.cmpi eq, %109, %110 : vector<8x128xi32>
    %cst_37 = arith.constant 0.000000e+00 : f32
    %112 = vector.broadcast %42 : f32 to vector<8x128xf32>
    %113 = vector.broadcast %cst_37 : f32 to vector<8x128xf32>
    %114 = arith.select %111, %112, %113 : vector<8x128xi1>, vector<8x128xf32>
    %c1_i32 = arith.constant 1 : i32
    %115 = vector.broadcast %c1_i32 : i32 to vector<8x128xi32>
    %116 = arith.cmpi eq, %109, %115 : vector<8x128xi32>
    %cst_38 = arith.constant 0.000000e+00 : f32
    %117 = vector.broadcast %48 : f32 to vector<8x128xf32>
    %118 = vector.broadcast %cst_38 : f32 to vector<8x128xf32>
    %119 = arith.select %116, %117, %118 : vector<8x128xi1>, vector<8x128xf32>
    %120 = arith.addf %114, %119 : vector<8x128xf32>
    %c2_i32 = arith.constant 2 : i32
    %121 = vector.broadcast %c2_i32 : i32 to vector<8x128xi32>
    %122 = arith.cmpi eq, %109, %121 : vector<8x128xi32>
    %cst_39 = arith.constant 0.000000e+00 : f32
    %123 = vector.broadcast %54 : f32 to vector<8x128xf32>
    %124 = vector.broadcast %cst_39 : f32 to vector<8x128xf32>
    %125 = arith.select %122, %123, %124 : vector<8x128xi1>, vector<8x128xf32>
    %126 = arith.addf %120, %125 : vector<8x128xf32>
    %c3_i32 = arith.constant 3 : i32
    %127 = vector.broadcast %c3_i32 : i32 to vector<8x128xi32>
    %128 = arith.cmpi eq, %109, %127 : vector<8x128xi32>
    %cst_40 = arith.constant 0.000000e+00 : f32
    %129 = vector.broadcast %102 : f32 to vector<8x128xf32>
    %130 = vector.broadcast %cst_40 : f32 to vector<8x128xf32>
    %131 = arith.select %128, %129, %130 : vector<8x128xi1>, vector<8x128xf32>
    %132 = arith.addf %126, %131 : vector<8x128xf32>
    %c4_i32 = arith.constant 4 : i32
    %133 = vector.broadcast %c4_i32 : i32 to vector<8x128xi32>
    %134 = arith.cmpi eq, %109, %133 : vector<8x128xi32>
    %cst_41 = arith.constant 0.000000e+00 : f32
    %135 = vector.broadcast %108 : f32 to vector<8x128xf32>
    %136 = vector.broadcast %cst_41 : f32 to vector<8x128xf32>
    %137 = arith.select %134, %135, %136 : vector<8x128xi1>, vector<8x128xf32>
    %138 = arith.addf %132, %137 : vector<8x128xf32>
    %c0_42 = arith.constant 0 : index
    %c0_43 = arith.constant 0 : index
    %c0_44 = arith.constant 0 : index
    %139 = vector.load %arg5[%c0_42, %c0_43, %c0_44] : memref<1x8x128xf32, #tpu.memory_space<vmem>>, vector<1x8x128xf32>
    %140 = vector.shape_cast %139 : vector<1x8x128xf32> to vector<8x128xf32>
    %141 = vector.shape_cast %138 : vector<8x128xf32> to vector<1x8x128xf32>
    tpu.vector_store %arg5[%c0_42, %c0_43, %c0_44], %141 {strides = array<i32>} : memref<1x8x128xf32, #tpu.memory_space<vmem>>, vector<1x8x128xf32>,
    return
  }
  func.func @transform_0(%arg0: i32) -> (i32, i32) {
    %c0_i32 = arith.constant 0 : i32
    %c0_i32_0 = arith.constant 0 : i32
    return %c0_i32, %arg0 : i32, i32
  }
  func.func @transform_1(%arg0: i32) -> (i32, i32) {
    %c0_i32 = arith.constant 0 : i32
    %c0_i32_0 = arith.constant 0 : i32
    return %arg0, %c0_i32 : i32, i32
  }
  func.func @transform_2(%arg0: i32) -> (i32, i32) {
    %c0_i32 = arith.constant 0 : i32
    %c0_i32_0 = arith.constant 0 : i32
    return %c0_i32, %arg0 : i32, i32
  }
  func.func @transform_3(%arg0: i32) -> (i32, i32) {
    %c0_i32 = arith.constant 0 : i32
    %c0_i32_0 = arith.constant 0 : i32
    return %arg0, %c0_i32 : i32, i32
  }
  func.func @transform_4(%arg0: i32) -> (i32, i32, i32) {
    %c0_i32 = arith.constant 0 : i32
    %c0_i32_0 = arith.constant 0 : i32
    %c0_i32_1 = arith.constant 0 : i32
    return %arg0, %c0_i32, %c0_i32_0 : i32, i32, i32
  }
}

</mosaic_0001>

<llo_original>
// kernel: tpu_custom_call.1
$region0: #{tpu_custom_call.1}
  #allocation0 [shape = 'u32[]', space=smem, size = 0x4, offset = 0x4, fixed_abs, tag = 'smem constant byte address 0x4 - core index']
  #allocation1 [shape = 'u32[72,128]{1,0:T(1,128)}', space=vmem, size = 0x9000, scoped, tag = 'internal scratch']
  %s0 = inlined_call_operand.hbm [shape: f32[2,8], index: 0, kind: input, shape index: {}]
  %s1 = inlined_call_operand.vmem [shape: f32[8,16], index: 1, kind: input, shape index: {}]
  %s2 = inlined_call_operand.vmem [shape: s32[1,8], index: 2, kind: input, shape index: {}]
  %s3 = inlined_call_operand.vmem [shape: s32[8,1], index: 3, kind: input, shape index: {}]
  %s4 = inlined_call_operand.hbm [shape: f32[1,8,128], index: 4, kind: output, shape index: {}]
  %s5 = sld [smem:[#allocation0]]
  $region30: #{tpu_custom_call.1} parent=0
    _
  %s7 = ssub.s32 1, %s5
  %s8 = scalar_select 0, %s7, %s5
  $region1: #{tpu_custom_call.1} parent=0
    #allocation2 [shape = 'u8[1024]{0}', space=vmem, size = 0x400, scoped, tag = 'input window, operand 0, single buffered']
    #allocation3 [shape = 's32[1]{0}', space=sflag, size = 0x4, scoped, tag = 'scoped memory for tpu_custom_call.1']
    #allocation4 [shape = 's32[1]{0}', space=sflag, size = 0x4, scoped, tag = 'scoped memory for tpu_custom_call.1']
    #allocation5 [shape = 'u8[4096]{0}', space=vmem, size = 0x1000, scoped, tag = 'output window, operand 0, single buffered']
    %9 = vsyncpa [#allocation3], 0
    %10 = vsyncpa [#allocation4], 0
    // Predicated region
    $region2: #{tpu_custom_call.1} parent=1 // pred_check
      _
    $region3: #{tpu_custom_call.1} parent=1 // pred_check_branch
      %12 = sbr.rel (0) target = $region5
    $region4: #{tpu_custom_call.1} parent=1 // pred_region
      %14 = vsyncadd [#allocation3], 0
      %s16 = sshll.u32 %s0, 4
      %s17 = int_to_ptr.hbm [resolvable:$true] %s16
      %s18 = sshll.u32 [#allocation2], 4
      %s19 = int_to_ptr.vmem [resolvable:$true] %s18
      %21 = dma.hbm_to_vmem [thread:$0]  %s17, 32, %s19, [#allocation3]
    $region5: #{tpu_custom_call.1} parent=1 // pred_fallthru
      _
    // Predicated region
    $region6: #{tpu_custom_call.1} parent=1 // pred_check
      _
    $region7: #{tpu_custom_call.1} parent=1 // pred_check_branch
      %23 = sbr.rel (0) target = $region9
    $region8: #{tpu_custom_call.1} parent=1 // pred_region
      _
    $region9: #{tpu_custom_call.1} parent=1 // pred_fallthru
      _
    // Predicated region
    $region10: #{tpu_custom_call.1} parent=1 // pred_check
      _
    $region11: #{tpu_custom_call.1} parent=1 // pred_check_branch
      %25 = sbr.rel (0) target = $region13
    $region12: #{tpu_custom_call.1} parent=1 // pred_region
      _
    $region13: #{tpu_custom_call.1} parent=1 // pred_fallthru
      _
    // Predicated region
    $region14: #{tpu_custom_call.1} parent=1 // pred_check
      _
    $region15: #{tpu_custom_call.1} parent=1 // pred_check_branch
      %27 = sbr.rel (0) target = $region17
    $region16: #{tpu_custom_call.1} parent=1 // pred_region
      _
    $region17: #{tpu_custom_call.1} parent=1 // pred_fallthru
      _
    // Predicated region
    $region18: #{tpu_custom_call.1} parent=1 // pred_check
      _
    $region19: #{tpu_custom_call.1} parent=1 // pred_check_branch
      %29 = sbr.rel (0) target = $region21
    $region20: #{tpu_custom_call.1} parent=1 // pred_region
      %31 = dma.done [#allocation3], 32
    $region21: #{tpu_custom_call.1} parent=1 // pred_fallthru
      _
    %v32 = vld [vmem:[#allocation2] sm:$0x3]
    %s33 = smul.u32 0, 8
    %v34 = vld [vmem:[%s2] sm:$0x1]
    %v35 = vlaneseq
    %v36 = vand.u32 %v35, 127
    %v37 = vstv %s33
    %v38 = vadd.s32 %v36, %v37
    %vm39 = vcmp.lt.s32.totalorder %v38, 8
    %vm40 = vcmask 58368
    %v41 = vsel %vm40, %v32, -inf
    %v42 = vrot.slane %v41, 4
    %v43 = vmax.f32 %v41, %v42
    %v44 = vrot.slane %v43, 2
    %v45 = vmax.f32 %v43, %v44
    %v46 = vrot.slane %v45, 1
    %v47 = vmax.f32 %v45, %v46
    %v48 = vsub.f32 %v32, %v47
    %v49 = vmul.f32 %v48, 1.442695
    %v50 = vpow.pop %v49
    %v51 = vsel %vm40, %v50, 0.0
    %v52 = vrot.slane %v51, 4
    %v53 = vadd.f32 %v51, %v52
    %v54 = vrot.slane %v53, 2
    %v55 = vadd.f32 %v53, %v54
    %v56 = vrot.slane %v55, 1
    %v57 = vadd.f32 %v55, %v56
    %v58 = vlog2.pop %v57
    %v59 = vmul.f32 %v58, 0.6931472
    %v60 = vadd.f32 %v47, %v59
    %v61 = vlaneseq
    %v62 = vshrl.u32 %v61, 7
    %v63 = vperm.slane %v34, 0
    %vm64 = vcmp.eq.s32.totalorder %v62, %v63
    %v65 = vsel %vm64, %v32, 0.0
    %v66 = vsel %vm40, %v65, 0.0
    %v67 = vrot.slane %v66, 4
    %v68 = vadd.f32 %v66, %v67
    %v69 = vrot.slane %v68, 2
    %v70 = vadd.f32 %v68, %v69
    %v71 = vrot.slane %v70, 1
    %v72 = vadd.f32 %v70, %v71
    %v73 = vsub.f32 %v60, %v72
    %v74 = vmul.f32 %v60, 2.0
    %v75 = vsel %vm40, %v32, 0.0
    %v76 = vrot.slane %v75, 4
    %v77 = vadd.f32 %v75, %v76
    %v78 = vrot.slane %v77, 2
    %v79 = vadd.f32 %v77, %v78
    %v80 = vrot.slane %v79, 1
    %v81 = vadd.f32 %v79, %v80
    %v82 = vsub.f32 %v74, %v81
    %v83 = vsub.f32 0.0, %v73
    %v84 = vmul.f32 %v83, 1.442695
    %v85 = vpow.pop %v84
    %v86 = vsub.f32 1.0, %v85
    %v87 = vmul.f32 %v86, %v86
    %v88 = vmul.f32 %v87, %v73
    %v89 = vsel %vm39, %v73, 0.0
    %vm90 = vcmask 57344
    %v91 = vsel %vm90, %v89, 0.0
    %92 = vadd.xlane.f32.xlu0 %v91
    %v93 = vpop.xlane.xlu0 %92
    %v94 = vrot.slane %v93, 4
    %v95 = vadd.f32 %v93, %v94
    %v96 = vrot.slane %v95, 2
    %v97 = vadd.f32 %v95, %v96
    %v98 = vrot.slane %v97, 1
    %v99 = vadd.f32 %v97, %v98
    %s100 = vtos %v99
    %v101 = vsel %vm39, %v82, 0.0
    %v102 = vsel %vm90, %v101, 0.0
    %103 = vadd.xlane.f32.xlu0 %v102
    %v104 = vpop.xlane.xlu0 %103
    %v105 = vrot.slane %v104, 4
    %v106 = vadd.f32 %v104, %v105
    %v107 = vrot.slane %v106, 2
    %v108 = vadd.f32 %v106, %v107
    %v109 = vrot.slane %v108, 1
    %v110 = vadd.f32 %v108, %v109
    %s111 = vtos %v110
    %v112 = vsel %vm39, %v88, 0.0
    %v113 = vsel %vm90, %v112, 0.0
    %114 = vadd.xlane.f32.xlu0 %v113
    %v115 = vpop.xlane.xlu0 %114
    %v116 = vrot.slane %v115, 4
    %v117 = vadd.f32 %v115, %v116
    %v118 = vrot.slane %v117, 2
    %v119 = vadd.f32 %v117, %v118
    %v120 = vrot.slane %v119, 1
    %v121 = vadd.f32 %v119, %v120
    %s122 = vtos %v121
    %v123 = vld [vmem:[%s3] sm:$0xff]
    %v124 = vadd.s32 %v62, %v37
    %vm125 = vcmp.lt.s32.totalorder %v124, 8
    %v126 = vld [vmem:[%s1] sm:$0xff]
    %vm127 = vcmask 130048
    %v128 = vsel %vm127, %v126, 0.0
    %129 = vadd.xlane.f32.xlu0 %v128
    %v130 = vpop.xlane.xlu0 %129
    %v131 = vadd.f32 %v130, 0.0
    %132 = vset.pattern.permute.xlu0 0
    %133 = vperm.xlu0 %132, %v123
    %v134 = vpop.permute.xlu0 %133
    %vm135 = vcmp.eq.s32.totalorder %v36, %v134
    %v136 = vsel %vm135, %v126, 0.0
    %v137 = vsel %vm127, %v136, 0.0
    %138 = vadd.xlane.f32.xlu0 %v137
    %v139 = vpop.xlane.xlu0 %138
    %v140 = vadd.f32 %v139, 0.0
    %v141 = vsel %vm127, %v126, -inf
    %142 = vmax.xlane.f32.xlu0 %v141
    %v143 = vpop.xlane.xlu0 %142
    %v144 = vsub.f32 -inf, %v143
    %v145 = vmul.f32 %v144, 1.442695
    %v146 = vpow.pop %v145
    %v147 = vmul.f32 %v146, 0.0
    %v148 = vsub.f32 %v126, %v143
    %v149 = vmul.f32 %v148, 1.442695
    %v150 = vpow.pop %v149
    %v151 = vsel %vm127, %v150, 0.0
    %152 = vadd.xlane.f32.xlu0 %v151
    %v153 = vpop.xlane.xlu0 %152
    %v154 = vadd.f32 %v147, %v153
    %v155 = vlog2.pop %v154
    %v156 = vmul.f32 %v155, 0.6931472
    %v157 = vadd.f32 %v143, %v156
    %v158 = vsub.f32 %v157, %v140
    %v159 = vmul.f32 %v157, 16.0
    %v160 = vsub.f32 %v159, %v131
    %v161 = vsel %vm125, %v158, 0.0
    %vm162 = vcmask 7168
    %v163 = vsel %vm162, %v161, 0.0
    %164 = vadd.xlane.f32.xlu0 %v163
    %v165 = vpop.xlane.xlu0 %164
    %v166 = vrot.slane %v165, 4
    %v167 = vadd.f32 %v165, %v166
    %v168 = vrot.slane %v167, 2
    %v169 = vadd.f32 %v167, %v168
    %v170 = vrot.slane %v169, 1
    %v171 = vadd.f32 %v169, %v170
    %s172 = vtos %v171
    %v173 = vsel %vm125, %v160, 0.0
    %v174 = vsel %vm162, %v173, 0.0
    %175 = vadd.xlane.f32.xlu0 %v174
    %v176 = vpop.xlane.xlu0 %175
    %v177 = vrot.slane %v176, 4
    %v178 = vadd.f32 %v176, %v177
    %v179 = vrot.slane %v178, 2
    %v180 = vadd.f32 %v178, %v179
    %v181 = vrot.slane %v180, 1
    %v182 = vadd.f32 %v180, %v181
    %s183 = vtos %v182
    %vm184 = vcmp.eq.s32.totalorder %v62, 0
    %v185 = vstv %s100
    %v186 = vsel %vm184, %v185, 0.0
    %vm187 = vcmp.eq.s32.totalorder %v62, 1
    %v188 = vstv %s111
    %v189 = vsel %vm187, %v188, 0.0
    %v190 = vadd.f32 %v186, %v189
    %vm191 = vcmp.eq.s32.totalorder %v62, 2
    %v192 = vstv %s122
    %v193 = vsel %vm191, %v192, 0.0
    %v194 = vadd.f32 %v190, %v193
    %vm195 = vcmp.eq.s32.totalorder %v62, 3
    %v196 = vstv %s172
    %v197 = vsel %vm195, %v196, 0.0
    %v198 = vadd.f32 %v194, %v197
    %vm199 = vcmp.eq.s32.totalorder %v62, 4
    %v200 = vstv %s183
    %v201 = vsel %vm199, %v200, 0.0
    %v202 = vadd.f32 %v198, %v201
    %203 = vst [vmem:[#allocation5] sm:$0xff] %v202
    // Predicated region
    $region22: #{tpu_custom_call.1} parent=1 // pred_check
      _
    $region23: #{tpu_custom_call.1} parent=1 // pred_check_branch
      %205 = sbr.rel (0) target = $region25
    $region24: #{tpu_custom_call.1} parent=1 // pred_region
      %207 = vsyncadd [#allocation4], 0
      %s209 = sshll.u32 [#allocation5], 4
      %s210 = int_to_ptr.vmem [resolvable:$true] %s209
      %s211 = sshll.u32 %s4, 4
      %s212 = int_to_ptr.hbm [resolvable:$true] %s211
      %214 = dma.vmem_to_hbm [thread:$0]  %s210, 128, %s212, [#allocation4]
    $region25: #{tpu_custom_call.1} parent=1 // pred_fallthru
      _
    // Predicated region
    $region26: #{tpu_custom_call.1} parent=1 // pred_check
      _
    $region27: #{tpu_custom_call.1} parent=1 // pred_check_branch
      %216 = sbr.rel (0) target = $region29
    $region28: #{tpu_custom_call.1} parent=1 // pred_region
      %218 = dma.done [#allocation4], 128
    $region29: #{tpu_custom_call.1} parent=1 // pred_fallthru
      _
    %219 = vsyncpa [#allocation3], 1
    %220 = vsyncpa [#allocation4], 1

</llo_original>
